<compile_context>
chip_gen: v5e
topology: v5e:2x2
jax: 0.10.0
libtpu: 0.0.40
codegen_flags: <defaults>
</compile_context>

<pallas_src>
import jax
import jax.numpy as jnp
from jax.experimental import pallas as pl
from jax.experimental.pallas import tpu as pltpu

EPS = 1e-5


# ----------------------------------------------------------------------------
# Fused Pallas kernel: (conv3x3 + BN + ReLU) x 2 on one image per grid step.
# All tensors are in lane-dense slab layout (rows = H, lanes = W*C).
# ----------------------------------------------------------------------------
def convblock_kernel(x_ref, m1_ref, b1_ref, m2_ref, b2_ref, o_ref,
                     pad1_ref, pad2_ref):
    # x_ref:    (1, H, W*Cin)        input slab for this batch element
    # m1_ref:   (3, W*Cin, W*C1)     banded conv1 weights (BN scale folded in)
    # b1_ref:   (1, W*C1)            folded BN1 bias slab (incl. conv bias)
    # m2_ref:   (3, W*C1, W*C2)      banded conv2 weights (BN scale folded in)
    # b2_ref:   (1, W*C2)            folded BN2 bias slab
    # o_ref:    (1, H, W*C2)         output slab (lane dense)
    # pad1_ref: VMEM (H+2, W*Cin)    H-halo-padded input
    # pad2_ref: VMEM (H+2, W*C1)     H-halo-padded intermediate (never in HBM)
    H = o_ref.shape[1]

    # ---- stage 1: conv3x3 + folded BN + ReLU --------------------------------
    pad1_ref[...] = jnp.zeros_like(pad1_ref)        # zero H halo rows
    pad1_ref[1:H + 1, :] = x_ref[0]
    y1 = jnp.dot(pad1_ref[0:H, :], m1_ref[0],
                 preferred_element_type=jnp.float32)
    y1 = y1 + jnp.dot(pad1_ref[1:H + 1, :], m1_ref[1],
                      preferred_element_type=jnp.float32)
    y1 = y1 + jnp.dot(pad1_ref[2:H + 2, :], m1_ref[2],
                      preferred_element_type=jnp.float32)
    y1 = jnp.maximum(y1 + b1_ref[0], 0.0)           # (H, W*C1)

    # ---- stage 2: conv3x3 + folded BN + ReLU (input stays in VMEM) ----------
    pad2_ref[...] = jnp.zeros_like(pad2_ref)
    pad2_ref[1:H + 1, :] = y1
    y2 = jnp.dot(pad2_ref[0:H, :], m2_ref[0],
                 preferred_element_type=jnp.float32)
    y2 = y2 + jnp.dot(pad2_ref[1:H + 1, :], m2_ref[1],
                      preferred_element_type=jnp.float32)
    y2 = y2 + jnp.dot(pad2_ref[2:H + 2, :], m2_ref[2],
                      preferred_element_type=jnp.float32)
    y2 = jnp.maximum(y2 + b2_ref[0], 0.0)           # (H, W*C2)

    o_ref[...] = y2[None].astype(o_ref.dtype)


# ----------------------------------------------------------------------------
# Host-side parameter folding: eval-mode BN + conv bias -> (banded M, bias slab)
# ----------------------------------------------------------------------------
def fold_banded(p, W):
    """Build, for each kernel row dy, the banded (block-Toeplitz) matrix that
    performs the along-W convolution in slab layout, with the BN scale folded
    into the weights:
        M[dy, j*Cin + c, w*Cout + co] = scale[co] * W[dy, j-w+1, c, co]
    (zero outside the band).  The W-direction padding=1 is implicit in the
    band; the H-direction padding is handled by the kernel's VMEM halo rows.
    """
    scale = p["gamma"] / jnp.sqrt(p["r_var"] + EPS)
    bias = p["beta"] + scale * (p["b_conv"] - p["r_mean"])
    w_hwio = jnp.transpose(p["w_oihw"], (2, 3, 1, 0))        # OIHW -> HWIO
    kh, kw, cin, cout = w_hwio.shape
    w_scaled = w_hwio * scale[None, None, None, :]

    j = jnp.arange(W)[:, None]             # input column index
    w = jnp.arange(W)[None, :]             # output column index
    dx = j - w + 1                         # tap index along W (padding = 1)
    valid = (dx >= 0) & (dx < kw)
    band = w_scaled[:, jnp.clip(dx, 0, kw - 1), :, :]         # (3, W, W, Cin, Cout)
    band = band * valid[None, :, :, None, None]
    band = jnp.transpose(band, (0, 1, 3, 2, 4)).reshape(kh, W * cin, W * cout)
    bias_slab = jnp.tile(bias, W)[None, :]                    # (1, W*Cout)
    return band.astype(jnp.float32), bias_slab.astype(jnp.float32)


# ----------------------------------------------------------------------------
# ConvBlock forward (NCHW in / NCHW out, PyTorch convention)
# ----------------------------------------------------------------------------
def conv_block_forward(x_nchw, params1, params2):
    N, cin, H, W = x_nchw.shape
    c1 = params1["w_oihw"].shape[0]
    c2 = params2["w_oihw"].shape[0]

    m1, b1 = fold_banded(params1, W)       # (3, W*cin, W*c1), (1, W*c1)
    m2, b2 = fold_banded(params2, W)       # (3, W*c1, W*c2),  (1, W*c2)

    # Single NCHW->NHWC transpose; the slab reshape is free.
    x_slab = jnp.transpose(x_nchw, (0, 2, 3, 1)).reshape(N, H, W * cin)

    flops = 2 * N * H * W * 9 * (cin * c1 + c1 * c2)
    bytes_accessed = 4 * (N * H * W * cin + m1.size + b1.size
                          + m2.size + b2.size + N * H * W * c2)

    y_slab = pl.pallas_call(
        convblock_kernel,
        out_shape=jax.ShapeDtypeStruct((N, H, W * c2), x_nchw.dtype),
        grid_spec=pltpu.PrefetchScalarGridSpec(
            num_scalar_prefetch=0,
            grid=(N,),
            in_specs=[
                pl.BlockSpec((1, H, W * cin), lambda n: (n, 0, 0)),
                pl.BlockSpec((3, W * cin, W * c1), lambda n: (0, 0, 0)),
                pl.BlockSpec((1, W * c1), lambda n: (0, 0)),
                pl.BlockSpec((3, W * c1, W * c2), lambda n: (0, 0, 0)),
                pl.BlockSpec((1, W * c2), lambda n: (0, 0)),
            ],
            out_specs=pl.BlockSpec((1, H, W * c2), lambda n: (n, 0, 0)),
            scratch_shapes=[
                pltpu.VMEM((H + 2, W * cin), jnp.float32),
                pltpu.VMEM((H + 2, W * c1), jnp.float32),
            ],
        ),
        compiler_params=pltpu.CompilerParams(
            dimension_semantics=("parallel",),
            vmem_limit_bytes=32 * 1024 * 1024,
        ),
        cost_estimate=pl.CostEstimate(
            flops=flops, transcendentals=0, bytes_accessed=bytes_accessed),
    )(x_slab, m1, b1, m2, b2)

    # Free reshape, single NHWC->NCHW transpose.
    return jnp.transpose(y_slab.reshape(N, H, W, c2), (0, 3, 1, 2))


# ----------------------------------------------------------------------------
# Parameter construction (deterministic) + pure-JAX reference (eval-mode BN)
# ----------------------------------------------------------------------------
def make_conv_bn_params(key, cin, cout):
    ks = jax.random.split(key, 6)
    w_oihw = jax.random.normal(ks[0], (cout, cin, 3, 3), jnp.float32) * 0.1
    b_conv = jax.random.normal(ks[1], (cout,), jnp.float32) * 0.1
    gamma = 1.0 + 0.1 * jax.random.normal(ks[2], (cout,), jnp.float32)
    beta = 0.1 * jax.random.normal(ks[3], (cout,), jnp.float32)
    r_mean = 0.1 * jax.random.normal(ks[4], (cout,), jnp.float32)
    r_var = jax.random.uniform(ks[5], (cout,), jnp.float32, 0.5, 1.5)
    return dict(w_oihw=w_oihw, b_conv=b_conv, gamma=gamma, beta=beta,
                r_mean=r_mean, r_var=r_var)


def ref_conv_bn_relu(x_nchw, p):
    y = jax.lax.conv_general_dilated(
        x_nchw, p["w_oihw"], window_strides=(1, 1),
        padding=((1, 1), (1, 1)),
        dimension_numbers=("NCHW", "OIHW", "NCHW"),
    )
    y = y + p["b_conv"][None, :, None, None]
    y = (y - p["r_mean"][None, :, None, None]) / jnp.sqrt(
        p["r_var"][None, :, None, None] + EPS)
    y = p["gamma"][None, :, None, None] * y + p["beta"][None, :, None, None]
    return jnp.maximum(y, 0.0)


def ref_conv_block(x_nchw, params1, params2):
    return ref_conv_bn_relu(ref_conv_bn_relu(x_nchw, params1), params2)


if __name__ == "__main__":
    key = jax.random.PRNGKey(0)
    k_x, k_p1, k_p2 = jax.random.split(key, 3)

    N, C_IN, C_OUT, H, W = 2, 4, 8, 16, 16
    x = jax.random.normal(k_x, (N, C_IN, H, W), jnp.float32)

    params1 = make_conv_bn_params(k_p1, C_IN, C_OUT)
    params2 = make_conv_bn_params(k_p2, C_OUT, C_OUT)

    out = jax.block_until_ready(conv_block_forward(x, params1, params2))
    ref = jax.block_until_ready(ref_conv_block(x, params1, params2))

    assert out.shape == (N, C_OUT, H, W)
    max_err = float(jnp.max(jnp.abs(out - ref)))
    assert jnp.allclose(out, ref, atol=1e-4, rtol=1e-4), max_err

    print("KERNEL_OK")
</pallas_src>

<mosaic_0001>
module attributes {stable_mosaic.version = 11 : i64} {
  func.func @convblock_kernel(%arg0: i32, %arg1: memref<1x16x64xf32, #tpu.memory_space<vmem>>, %arg2: memref<3x64x128xf32, #tpu.memory_space<vmem>>, %arg3: memref<1x128xf32, #tpu.memory_space<vmem>>, %arg4: memref<3x128x128xf32, #tpu.memory_space<vmem>>, %arg5: memref<1x128xf32, #tpu.memory_space<vmem>>, %arg6: memref<1x16x128xf32, #tpu.memory_space<vmem>>, %arg7: memref<18x64xf32, #tpu.memory_space<vmem>>, %arg8: memref<18x128xf32, #tpu.memory_space<vmem>>) attributes {dimension_semantics = [#tpu.dimension_semantics<parallel>], iteration_bounds = array<i64: 2>, scalar_prefetch = 0 : i64, scratch_operands = 2 : i64, tpu.core_type = #tpu.core_type<tc>, window_params = [{transform_indices = @transform_0, window_bounds = array<i64: 1, 16, 64>}, {pipeline_mode = #tpu.pipeline_mode<synchronous>, transform_indices = @transform_1, window_bounds = array<i64: 3, 64, 128>}, {pipeline_mode = #tpu.pipeline_mode<synchronous>, transform_indices = @transform_2, window_bounds = array<i64: 1, 128>}, {pipeline_mode = #tpu.pipeline_mode<synchronous>, transform_indices = @transform_3, window_bounds = array<i64: 3, 128, 128>}, {pipeline_mode = #tpu.pipeline_mode<synchronous>, transform_indices = @transform_4, window_bounds = array<i64: 1, 128>}, {transform_indices = @transform_5, window_bounds = array<i64: 1, 16, 128>}]} {
    %cst = arith.constant 0.000000e+00 : f32
    %0 = vector.broadcast %cst : f32 to vector<18x64xf32>
    %c0 = arith.constant 0 : index
    %c0_0 = arith.constant 0 : index
    %1 = vector.load %arg7[%c0, %c0_0] : memref<18x64xf32, #tpu.memory_space<vmem>>, vector<18x64xf32>
    tpu.vector_store %arg7[%c0, %c0_0], %0 {strides = array<i32>} : memref<18x64xf32, #tpu.memory_space<vmem>>, vector<18x64xf32>,
    %c0_1 = arith.constant 0 : index
    %c0_2 = arith.constant 0 : index
    %c0_3 = arith.constant 0 : index
    %2 = vector.load %arg1[%c0_1, %c0_2, %c0_3] : memref<1x16x64xf32, #tpu.memory_space<vmem>>, vector<1x16x64xf32>
    %3 = vector.shape_cast %2 : vector<1x16x64xf32> to vector<16x64xf32>
    %c1 = arith.constant 1 : index
    %c0_4 = arith.constant 0 : index
    %4 = vector.load %arg7[%c1, %c0_4] : memref<18x64xf32, #tpu.memory_space<vmem>>, vector<16x64xf32>
    tpu.vector_store %arg7[%c1, %c0_4], %3 {strides = array<i32>} : memref<18x64xf32, #tpu.memory_space<vmem>>, vector<16x64xf32>,
    %c0_5 = arith.constant 0 : index
    %c0_6 = arith.constant 0 : index
    %5 = vector.load %arg7[%c0_5, %c0_6] : memref<18x64xf32, #tpu.memory_space<vmem>>, vector<16x64xf32>
    %c0_7 = arith.constant 0 : index
    %c0_8 = arith.constant 0 : index
    %c0_9 = arith.constant 0 : index
    %6 = vector.load %arg2[%c0_7, %c0_8, %c0_9] : memref<3x64x128xf32, #tpu.memory_space<vmem>>, vector<1x64x128xf32>
    %7 = vector.shape_cast %6 : vector<1x64x128xf32> to vector<64x128xf32>
    %cst_10 = arith.constant dense<0.000000e+00> : vector<16x128xf32>
    %8 = tpu.matmul %5, %7, %cst_10 {dimension_numbers = #tpu.dot_dimension_numbers<[1], [0], [0], [1], [0, 0, 1, 1], [], []>} : vector<16x64xf32>, vector<64x128xf32>, vector<16x128xf32> -> vector<16x128xf32>
    %c1_11 = arith.constant 1 : index
    %c0_12 = arith.constant 0 : index
    %9 = vector.load %arg7[%c1_11, %c0_12] : memref<18x64xf32, #tpu.memory_space<vmem>>, vector<16x64xf32>
    %c1_13 = arith.constant 1 : index
    %c0_14 = arith.constant 0 : index
    %c0_15 = arith.constant 0 : index
    %10 = vector.load %arg2[%c1_13, %c0_14, %c0_15] : memref<3x64x128xf32, #tpu.memory_space<vmem>>, vector<1x64x128xf32>
    %11 = vector.shape_cast %10 : vector<1x64x128xf32> to vector<64x128xf32>
    %cst_16 = arith.constant dense<0.000000e+00> : vector<16x128xf32>
    %12 = tpu.matmul %9, %11, %cst_16 {dimension_numbers = #tpu.dot_dimension_numbers<[1], [0], [0], [1], [0, 0, 1, 1], [], []>} : vector<16x64xf32>, vector<64x128xf32>, vector<16x128xf32> -> vector<16x128xf32>
    %13 = arith.addf %8, %12 : vector<16x128xf32>
    %c2 = arith.constant 2 : index
    %c0_17 = arith.constant 0 : index
    %14 = vector.load %arg7[%c2, %c0_17] : memref<18x64xf32, #tpu.memory_space<vmem>>, vector<16x64xf32>
    %c2_18 = arith.constant 2 : index
    %c0_19 = arith.constant 0 : index
    %c0_20 = arith.constant 0 : index
    %15 = vector.load %arg2[%c2_18, %c0_19, %c0_20] : memref<3x64x128xf32, #tpu.memory_space<vmem>>, vector<1x64x128xf32>
    %16 = vector.shape_cast %15 : vector<1x64x128xf32> to vector<64x128xf32>
    %cst_21 = arith.constant dense<0.000000e+00> : vector<16x128xf32>
    %17 = tpu.matmul %14, %16, %cst_21 {dimension_numbers = #tpu.dot_dimension_numbers<[1], [0], [0], [1], [0, 0, 1, 1], [], []>} : vector<16x64xf32>, vector<64x128xf32>, vector<16x128xf32> -> vector<16x128xf32>
    %18 = arith.addf %13, %17 : vector<16x128xf32>
    %c0_22 = arith.constant 0 : index
    %c0_23 = arith.constant 0 : index
    %19 = vector.load %arg3[%c0_22, %c0_23] : memref<1x128xf32, #tpu.memory_space<vmem>>, vector<1x128xf32>
    %20 = vector.shape_cast %19 : vector<1x128xf32> to vector<128xf32>
    %21 = vector.shape_cast %20 : vector<128xf32> to vector<1x128xf32>
    %22 = vector.broadcast %21 : vector<1x128xf32> to vector<16x128xf32>
    %23 = arith.addf %18, %22 : vector<16x128xf32>
    %cst_24 = arith.constant 0.000000e+00 : f32
    %24 = vector.broadcast %cst_24 : f32 to vector<16x128xf32>
    %25 = arith.maximumf %23, %24 : vector<16x128xf32>
    %cst_25 = arith.constant 0.000000e+00 : f32
    %26 = vector.broadcast %cst_25 : f32 to vector<18x128xf32>
    %c0_26 = arith.constant 0 : index
    %c0_27 = arith.constant 0 : index
    %27 = vector.load %arg8[%c0_26, %c0_27] : memref<18x128xf32, #tpu.memory_space<vmem>>, vector<18x128xf32>
    tpu.vector_store %arg8[%c0_26, %c0_27], %26 {strides = array<i32>} : memref<18x128xf32, #tpu.memory_space<vmem>>, vector<18x128xf32>,
    %c1_28 = arith.constant 1 : index
    %c0_29 = arith.constant 0 : index
    %28 = vector.load %arg8[%c1_28, %c0_29] : memref<18x128xf32, #tpu.memory_space<vmem>>, vector<16x128xf32>
    tpu.vector_store %arg8[%c1_28, %c0_29], %25 {strides = array<i32>} : memref<18x128xf32, #tpu.memory_space<vmem>>, vector<16x128xf32>,
    %c0_30 = arith.constant 0 : index
    %c0_31 = arith.constant 0 : index
    %29 = vector.load %arg8[%c0_30, %c0_31] : memref<18x128xf32, #tpu.memory_space<vmem>>, vector<16x128xf32>
    %c0_32 = arith.constant 0 : index
    %c0_33 = arith.constant 0 : index
    %c0_34 = arith.constant 0 : index
    %30 = vector.load %arg4[%c0_32, %c0_33, %c0_34] : memref<3x128x128xf32, #tpu.memory_space<vmem>>, vector<1x128x128xf32>
    %31 = vector.shape_cast %30 : vector<1x128x128xf32> to vector<128x128xf32>
    %cst_35 = arith.constant dense<0.000000e+00> : vector<16x128xf32>
    %32 = tpu.matmul %29, %31, %cst_35 {dimension_numbers = #tpu.dot_dimension_numbers<[1], [0], [0], [1], [0, 0, 1, 1], [], []>} : vector<16x128xf32>, vector<128x128xf32>, vector<16x128xf32> -> vector<16x128xf32>
    %c1_36 = arith.constant 1 : index
    %c0_37 = arith.constant 0 : index
    %33 = vector.load %arg8[%c1_36, %c0_37] : memref<18x128xf32, #tpu.memory_space<vmem>>, vector<16x128xf32>
    %c1_38 = arith.constant 1 : index
    %c0_39 = arith.constant 0 : index
    %c0_40 = arith.constant 0 : index
    %34 = vector.load %arg4[%c1_38, %c0_39, %c0_40] : memref<3x128x128xf32, #tpu.memory_space<vmem>>, vector<1x128x128xf32>
    %35 = vector.shape_cast %34 : vector<1x128x128xf32> to vector<128x128xf32>
    %cst_41 = arith.constant dense<0.000000e+00> : vector<16x128xf32>
    %36 = tpu.matmul %33, %35, %cst_41 {dimension_numbers = #tpu.dot_dimension_numbers<[1], [0], [0], [1], [0, 0, 1, 1], [], []>} : vector<16x128xf32>, vector<128x128xf32>, vector<16x128xf32> -> vector<16x128xf32>
    %37 = arith.addf %32, %36 : vector<16x128xf32>
    %c2_42 = arith.constant 2 : index
    %c0_43 = arith.constant 0 : index
    %38 = vector.load %arg8[%c2_42, %c0_43] : memref<18x128xf32, #tpu.memory_space<vmem>>, vector<16x128xf32>
    %c2_44 = arith.constant 2 : index
    %c0_45 = arith.constant 0 : index
    %c0_46 = arith.constant 0 : index
    %39 = vector.load %arg4[%c2_44, %c0_45, %c0_46] : memref<3x128x128xf32, #tpu.memory_space<vmem>>, vector<1x128x128xf32>
    %40 = vector.shape_cast %39 : vector<1x128x128xf32> to vector<128x128xf32>
    %cst_47 = arith.constant dense<0.000000e+00> : vector<16x128xf32>
    %41 = tpu.matmul %38, %40, %cst_47 {dimension_numbers = #tpu.dot_dimension_numbers<[1], [0], [0], [1], [0, 0, 1, 1], [], []>} : vector<16x128xf32>, vector<128x128xf32>, vector<16x128xf32> -> vector<16x128xf32>
    %42 = arith.addf %37, %41 : vector<16x128xf32>
    %c0_48 = arith.constant 0 : index
    %c0_49 = arith.constant 0 : index
    %43 = vector.load %arg5[%c0_48, %c0_49] : memref<1x128xf32, #tpu.memory_space<vmem>>, vector<1x128xf32>
    %44 = vector.shape_cast %43 : vector<1x128xf32> to vector<128xf32>
    %45 = vector.shape_cast %44 : vector<128xf32> to vector<1x128xf32>
    %46 = vector.broadcast %45 : vector<1x128xf32> to vector<16x128xf32>
    %47 = arith.addf %42, %46 : vector<16x128xf32>
    %cst_50 = arith.constant 0.000000e+00 : f32
    %48 = vector.broadcast %cst_50 : f32 to vector<16x128xf32>
    %49 = arith.maximumf %47, %48 : vector<16x128xf32>
    %50 = vector.shape_cast %49 : vector<16x128xf32> to vector<1x16x128xf32>
    %c0_51 = arith.constant 0 : index
    %c0_52 = arith.constant 0 : index
    %c0_53 = arith.constant 0 : index
    %51 = vector.load %arg6[%c0_51, %c0_52, %c0_53] : memref<1x16x128xf32, #tpu.memory_space<vmem>>, vector<1x16x128xf32>
    tpu.vector_store %arg6[%c0_51, %c0_52, %c0_53], %50 {strides = array<i32>} : memref<1x16x128xf32, #tpu.memory_space<vmem>>, vector<1x16x128xf32>,
    return
  }
  func.func @transform_0(%arg0: i32) -> (i32, i32, i32) {
    %c0_i32 = arith.constant 0 : i32
    %c0_i32_0 = arith.constant 0 : i32
    %c0_i32_1 = arith.constant 0 : i32
    return %arg0, %c0_i32, %c0_i32_0 : i32, i32, i32
  }
  func.func @transform_1(%arg0: i32) -> (i32, i32, i32) {
    %c0_i32 = arith.constant 0 : i32
    %c0_i32_0 = arith.constant 0 : i32
    %c0_i32_1 = arith.constant 0 : i32
    %c0_i32_2 = arith.constant 0 : i32
    return %c0_i32, %c0_i32_0, %c0_i32_1 : i32, i32, i32
  }
  func.func @transform_2(%arg0: i32) -> (i32, i32) {
    %c0_i32 = arith.constant 0 : i32
    %c0_i32_0 = arith.constant 0 : i32
    %c0_i32_1 = arith.constant 0 : i32
    return %c0_i32, %c0_i32_0 : i32, i32
  }
  func.func @transform_3(%arg0: i32) -> (i32, i32, i32) {
    %c0_i32 = arith.constant 0 : i32
    %c0_i32_0 = arith.constant 0 : i32
    %c0_i32_1 = arith.constant 0 : i32
    %c0_i32_2 = arith.constant 0 : i32
    return %c0_i32, %c0_i32_0, %c0_i32_1 : i32, i32, i32
  }
  func.func @transform_4(%arg0: i32) -> (i32, i32) {
    %c0_i32 = arith.constant 0 : i32
    %c0_i32_0 = arith.constant 0 : i32
    %c0_i32_1 = arith.constant 0 : i32
    return %c0_i32, %c0_i32_0 : i32, i32
  }
  func.func @transform_5(%arg0: i32) -> (i32, i32, i32) {
    %c0_i32 = arith.constant 0 : i32
    %c0_i32_0 = arith.constant 0 : i32
    %c0_i32_1 = arith.constant 0 : i32
    return %arg0, %c0_i32, %c0_i32_0 : i32, i32, i32
  }
}

</mosaic_0001>

<llo_original>
// kernel: tpu_custom_call.1
$region0: #{tpu_custom_call.1}
  #allocation0 [shape = 'u32[]', space=smem, size = 0x4, offset = 0x4, fixed_abs, tag = 'smem constant byte address 0x4 - core index']
  #allocation1 [shape = 'u32[72,128]{1,0:T(1,128)}', space=vmem, size = 0x9000, scoped, tag = 'internal scratch']
  #allocation2 [shape = 'f32[18,64]{1,0:T(8,128)}', space=vmem, size = 0x3000, scoped, tag = 'scratch operand']
  #allocation3 [shape = 'f32[18,128]{1,0:T(8,128)}', space=vmem, size = 0x3000, scoped, tag = 'scratch operand']
  %s0 = inlined_call_operand.hbm [shape: f32[2,16,64], index: 0, kind: input, shape index: {}]
  %s1 = inlined_call_operand.hbm [shape: f32[3,64,128], index: 1, kind: input, shape index: {}]
  %s2 = inlined_call_operand.vmem [shape: f32[1,128], index: 2, kind: input, shape index: {}]
  %s3 = inlined_call_operand.hbm [shape: f32[3,128,128], index: 3, kind: input, shape index: {}]
  %s4 = inlined_call_operand.vmem [shape: f32[1,128], index: 4, kind: input, shape index: {}]
  %s5 = inlined_call_operand.hbm [shape: f32[2,16,128], index: 5, kind: output, shape index: {}]
  %s6 = sld [smem:[#allocation0]]
  $region65: #{tpu_custom_call.1} parent=0
    _
  %s8 = ssub.s32 1, %s6
  %s9 = scalar_select 0, %s8, %s6
  $region1: #{tpu_custom_call.1} parent=0
    #allocation4 [shape = 'u8[16384]{0}', space=vmem, size = 0x4000, scoped, tag = 'input window, operand 0']
    #allocation5 [shape = 's32[2]{0}', space=sflag, size = 0x8, scoped, tag = 'scoped memory for tpu_custom_call.1']
    #allocation6 [shape = 's32[2]{0}', space=sflag, size = 0x8, scoped, tag = 'scoped memory for tpu_custom_call.1']
    #allocation7 [shape = 'u8[98304]{0}', space=vmem, size = 0x18000, scoped, tag = 'input window, operand 1, single buffered']
    #allocation8 [shape = 's32[1]{0}', space=sflag, size = 0x4, scoped, tag = 'scoped memory for tpu_custom_call.1']
    #allocation9 [shape = 'u8[196608]{0}', space=vmem, size = 0x30000, scoped, tag = 'input window, operand 3, single buffered']
    #allocation10 [shape = 'u8[16384]{0}', space=vmem, size = 0x4000, scoped, tag = 'output window, operand 0']
    %10 = vsyncpa [#allocation5], 0
    %s11 = scalar_lea.sflag [#allocation5], 1
    %12 = vsyncpa %s11, 0
    %13 = vsyncpa [#allocation8], 0
    %14 = vsyncpa [#allocation6], 0
    %s15 = scalar_lea.sflag [#allocation6], 1
    %16 = vsyncpa %s15, 0
    loop: start=0, step=1, limit=4
    $region2: #{tpu_custom_call.1} parent=1 // loop_pre_header
      _
    $region3: #{tpu_custom_call.1} parent=1 // loop_header
      %s18 = sphi 0, %s22
      %p19 = scmp.ge.s32.totalorder %s18, 4
      %s28 = sphi 0, %s30
      %s31 = sphi 0, %s28
      %s32 = sphi 0, %s31
      %s48 = sphi 0, %s32
      %s52 = sphi 0, %s52
      %s54 = sphi 0, %s52
      %s55 = sphi 0, %s54
      %s69 = sphi 0, %s55
      %s73 = sphi 0, %s73
      %s75 = sphi 0, %s73
      %s76 = sphi 0, %s75
      %s90 = sphi 0, %s76
      %s94 = sphi 0, %s94
      %s96 = sphi 0, %s94
      %s97 = sphi 0, %s96
      %s111 = sphi 0, %s97
      %s115 = sphi 0, %s115
      %s117 = sphi 0, %s115
      %s118 = sphi 0, %s117
      %s132 = sphi 0, %s118
      %s138 = sphi 0, %s140
      %s141 = sphi 0, %s138
      %s142 = sphi 0, %s141
      %s158 = sphi 0, %s142
    $region4: #{tpu_custom_call.1} parent=1 // loop_header_branch
      %21 = sbr.rel (%p19) target = $region8
    $region5: #{tpu_custom_call.1} parent=1 // loop_body
      %s23 = ssub.s32 %s18, 1
      %s24 = ssub.s32 %s18, 2
      %s25 = sadd.s32 %s18, 1
      %s26 = ssub.s32 %s18, %s25
      %p27 = scmp.eq.s32.totalorder %s26, 0
      %s29 = sadd.s32 %s28, 1
      %s30 = scalar_select %p27, %s28, %s29
      %p33 = pneg %p27
      %p34 = scmp.eq.s32.totalorder %s18, 1
      %p35 = por %p33, %p34
      %p36 = scmp.ne.s32.totalorder %s28, %s31
      %p37 = scmp.eq.s32.totalorder %s18, 0
      %p38 = por %p36, %p37
      %p39 = scmp.ne.s32.totalorder %s28, %s31
      %p40 = scmp.eq.s32.totalorder %s23, 1
      %p41 = por %p39, %p40
      %p42 = scmp.ne.s32.totalorder %s31, %s32
      %p43 = scmp.eq.s32.totalorder %s23, 0
      %p44 = por %p42, %p43
      %p45 = scmp.ne.s32.totalorder %s31, %s32
      %p46 = scmp.eq.s32.totalorder %s24, 1
      %p47 = por %p45, %p46
      %p49 = scmp.ne.s32.totalorder %s32, %s48
      %p50 = scmp.eq.s32.totalorder %s24, 0
      %p51 = por %p49, %p50
      %s53 = sadd.s32 %s52, 1
      %p56 = scmp.eq.s32.totalorder %s18, 1
      %p57 = scmp.ne.s32.totalorder %s52, %s54
      %p58 = scmp.eq.s32.totalorder %s18, 0
      %p59 = por %p57, %p58
      %p60 = scmp.ne.s32.totalorder %s52, %s54
      %p61 = scmp.eq.s32.totalorder %s23, 1
      %p62 = por %p60, %p61
      %p63 = scmp.ne.s32.totalorder %s54, %s55
      %p64 = scmp.eq.s32.totalorder %s23, 0
      %p65 = por %p63, %p64
      %p66 = scmp.ne.s32.totalorder %s54, %s55
      %p67 = scmp.eq.s32.totalorder %s24, 1
      %p68 = por %p66, %p67
      %p70 = scmp.ne.s32.totalorder %s55, %s69
      %p71 = scmp.eq.s32.totalorder %s24, 0
      %p72 = por %p70, %p71
      %s74 = sadd.s32 %s73, 1
      %p77 = scmp.eq.s32.totalorder %s18, 1
      %p78 = scmp.ne.s32.totalorder %s73, %s75
      %p79 = scmp.eq.s32.totalorder %s18, 0
      %p80 = por %p78, %p79
      %p81 = scmp.ne.s32.totalorder %s73, %s75
      %p82 = scmp.eq.s32.totalorder %s23, 1
      %p83 = por %p81, %p82
      %p84 = scmp.ne.s32.totalorder %s75, %s76
      %p85 = scmp.eq.s32.totalorder %s23, 0
      %p86 = por %p84, %p85
      %p87 = scmp.ne.s32.totalorder %s75, %s76
      %p88 = scmp.eq.s32.totalorder %s24, 1
      %p89 = por %p87, %p88
      %p91 = scmp.ne.s32.totalorder %s76, %s90
      %p92 = scmp.eq.s32.totalorder %s24, 0
      %p93 = por %p91, %p92
      %s95 = sadd.s32 %s94, 1
      %p98 = scmp.eq.s32.totalorder %s18, 1
      %p99 = scmp.ne.s32.totalorder %s94, %s96
      %p100 = scmp.eq.s32.totalorder %s18, 0
      %p101 = por %p99, %p100
      %p102 = scmp.ne.s32.totalorder %s94, %s96
      %p103 = scmp.eq.s32.totalorder %s23, 1
      %p104 = por %p102, %p103
      %p105 = scmp.ne.s32.totalorder %s96, %s97
      %p106 = scmp.eq.s32.totalorder %s23, 0
      %p107 = por %p105, %p106
      %p108 = scmp.ne.s32.totalorder %s96, %s97
      %p109 = scmp.eq.s32.totalorder %s24, 1
      %p110 = por %p108, %p109
      %p112 = scmp.ne.s32.totalorder %s97, %s111
      %p113 = scmp.eq.s32.totalorder %s24, 0
      %p114 = por %p112, %p113
      %s116 = sadd.s32 %s115, 1
      %p119 = scmp.eq.s32.totalorder %s18, 1
      %p120 = scmp.ne.s32.totalorder %s115, %s117
      %p121 = scmp.eq.s32.totalorder %s18, 0
      %p122 = por %p120, %p121
      %p123 = scmp.ne.s32.totalorder %s115, %s117
      %p124 = scmp.eq.s32.totalorder %s23, 1
      %p125 = por %p123, %p124
      %p126 = scmp.ne.s32.totalorder %s117, %s118
      %p127 = scmp.eq.s32.totalorder %s23, 0
      %p128 = por %p126, %p127
      %p129 = scmp.ne.s32.totalorder %s117, %s118
      %p130 = scmp.eq.s32.totalorder %s24, 1
      %p131 = por %p129, %p130
      %p133 = scmp.ne.s32.totalorder %s118, %s132
      %p134 = scmp.eq.s32.totalorder %s24, 0
      %p135 = por %p133, %p134
      %s136 = ssub.s32 %s18, %s25
      %p137 = scmp.eq.s32.totalorder %s136, 0
      %s139 = sadd.s32 %s138, 1
      %s140 = scalar_select %p137, %s138, %s139
      %p143 = pneg %p137
      %p144 = scmp.eq.s32.totalorder %s18, 1
      %p145 = por %p143, %p144
      %p146 = scmp.ne.s32.totalorder %s138, %s141
      %p147 = scmp.eq.s32.totalorder %s18, 0
      %p148 = por %p146, %p147
      %p149 = scmp.ne.s32.totalorder %s138, %s141
      %p150 = scmp.eq.s32.totalorder %s23, 1
      %p151 = por %p149, %p150
      %p152 = scmp.ne.s32.totalorder %s141, %s142
      %p153 = scmp.eq.s32.totalorder %s23, 0
      %p154 = por %p152, %p153
      %p155 = scmp.ne.s32.totalorder %s141, %s142
      %p156 = scmp.eq.s32.totalorder %s24, 1
      %p157 = por %p155, %p156
      %p159 = scmp.ne.s32.totalorder %s142, %s158
      %p160 = scmp.eq.s32.totalorder %s24, 0
      %p161 = por %p159, %p160
      %p162 = scmp.le.s32.totalorder 1, %s18
      %p163 = scmp.lt.s32.totalorder %s18, 3
      %p164 = pnand %p162, %p163
      %p165 = pneg %p164
      // Predicated region
      $region9: #{tpu_custom_call.1} parent=5 // pred_check
        _
      $region10: #{tpu_custom_call.1} parent=5 // pred_check_branch
        %167 = sbr.rel (%p164) target = $region12
      $region11: #{tpu_custom_call.1} parent=5 // pred_region
        %s168 = ssub.s32 %s18, 1
        // Predicated region
        $region13: #{tpu_custom_call.1} parent=11 // pred_check
          %p169 = pneg %p65
        $region14: #{tpu_custom_call.1} parent=11 // pred_check_branch
          %171 = sbr.rel (%p169) target = $region16
        $region15: #{tpu_custom_call.1} parent=11 // pred_region
          %173 = vsyncadd [#allocation8], 0
          %s174 = sshll.u32 %s1, 4
          %s175 = int_to_ptr.hbm [resolvable:$true] %s174
          %s176 = sshll.u32 [#allocation7], 4
          %s177 = int_to_ptr.vmem [resolvable:$true] %s176
          %182 = dma.hbm_to_vmem [thread:$0]  %s175, 3072, %s177, [#allocation8], 128, 128, 8
        $region16: #{tpu_custom_call.1} parent=11 // pred_fallthru
          _
        // Predicated region
        $region17: #{tpu_custom_call.1} parent=11 // pred_check
          %p183 = pneg %p86
        $region18: #{tpu_custom_call.1} parent=11 // pred_check_branch
          %185 = sbr.rel (%p183) target = $region20
        $region19: #{tpu_custom_call.1} parent=11 // pred_region
          _
        $region20: #{tpu_custom_call.1} parent=11 // pred_fallthru
          _
        // Predicated region
        $region21: #{tpu_custom_call.1} parent=11 // pred_check
          %p186 = pneg %p107
        $region22: #{tpu_custom_call.1} parent=11 // pred_check_branch
          %188 = sbr.rel (%p186) target = $region24
        $region23: #{tpu_custom_call.1} parent=11 // pred_region
          %190 = vsyncadd [#allocation8], 0
          %s191 = sshll.u32 %s3, 4
          %s192 = int_to_ptr.hbm [resolvable:$true] %s191
          %s193 = sshll.u32 [#allocation9], 4
          %s194 = int_to_ptr.vmem [resolvable:$true] %s193
          %199 = dma.hbm_to_vmem [thread:$0]  %s192, 6144, %s194, [#allocation8], 128, 128, 8
        $region24: #{tpu_custom_call.1} parent=11 // pred_fallthru
          _
        // Predicated region
        $region25: #{tpu_custom_call.1} parent=11 // pred_check
          %p200 = pneg %p128
        $region26: #{tpu_custom_call.1} parent=11 // pred_check_branch
          %202 = sbr.rel (%p200) target = $region28
        $region27: #{tpu_custom_call.1} parent=11 // pred_region
          _
        $region28: #{tpu_custom_call.1} parent=11 // pred_fallthru
          _
      $region12: #{tpu_custom_call.1} parent=5 // pred_fallthru
        _
      %p203 = scmp.lt.s32.totalorder %s18, 2
      // Predicated region
      $region29: #{tpu_custom_call.1} parent=5 // pred_check
        %p204 = pneg %p203
      $region30: #{tpu_custom_call.1} parent=5 // pred_check_branch
        %206 = sbr.rel (%p204) target = $region32
      $region31: #{tpu_custom_call.1} parent=5 // pred_region
        // Predicated region
        $region33: #{tpu_custom_call.1} parent=31 // pred_check
          %p207 = pneg %p38
        $region34: #{tpu_custom_call.1} parent=31 // pred_check_branch
          %209 = sbr.rel (%p207) target = $region36
        $region35: #{tpu_custom_call.1} parent=31 // pred_region
          %s210 = sand.u32 %s28, 1
          %s211 = scalar_lea.sflag [#allocation5], %s210
          %s212 = sand.u32 %s28, 1
          %s213 = smul.addr %s212, 16
          %s214 = scalar_lea.vmem [#allocation4], %s213
          %216 = vsyncadd %s211, 0
          %s217 = smul.addr %s18, 2
          %s218 = smul.addr %s217, 8
          %s219 = scalar_lea.hbm %s0, %s218
          %s220 = sshll.u32 %s219, 4
          %s221 = int_to_ptr.hbm [resolvable:$true] %s220
          %s222 = sshll.u32 %s214, 4
          %s223 = int_to_ptr.vmem [resolvable:$true] %s222
          %228 = dma.hbm_to_vmem [thread:$0]  %s221, 256, %s223, %s211, 128, 128, 8
        $region36: #{tpu_custom_call.1} parent=31 // pred_fallthru
          _
      $region32: #{tpu_custom_call.1} parent=5 // pred_fallthru
        _
      %p229 = scmp.le.s32.totalorder 1, %s18
      %p230 = scmp.lt.s32.totalorder %s18, 3
      %p231 = pnand %p229, %p230
      %p232 = pneg %p231
      // Predicated region
      $region37: #{tpu_custom_call.1} parent=5 // pred_check
        _
      $region38: #{tpu_custom_call.1} parent=5 // pred_check_branch
        %234 = sbr.rel (%p231) target = $region40
      $region39: #{tpu_custom_call.1} parent=5 // pred_region
        %s235 = ssub.s32 %s18, 1
        %s236 = sand.u32 %s31, 1
        %s237 = scalar_lea.sflag [#allocation5], %s236
        %s238 = sand.u32 %s31, 1
        %s239 = smul.addr %s238, 16
        %s240 = scalar_lea.vmem [#allocation4], %s239
        // Predicated region
        $region41: #{tpu_custom_call.1} parent=39 // pred_check
          %p241 = pneg %p44
        $region42: #{tpu_custom_call.1} parent=39 // pred_check_branch
          %243 = sbr.rel (%p241) target = $region44
        $region43: #{tpu_custom_call.1} parent=39 // pred_region
          %245 = dma.done %s237, 256
        $region44: #{tpu_custom_call.1} parent=39 // pred_fallthru
          _
        // Predicated region
        $region45: #{tpu_custom_call.1} parent=39 // pred_check
          %p246 = pneg %p65
        $region46: #{tpu_custom_call.1} parent=39 // pred_check_branch
          %248 = sbr.rel (%p246) target = $region48
        $region47: #{tpu_custom_call.1} parent=39 // pred_region
          %250 = dma.done [#allocation8], 3072
        $region48: #{tpu_custom_call.1} parent=39 // pred_fallthru
          _
        // Predicated region
        $region49: #{tpu_custom_call.1} parent=39 // pred_check
          %p251 = pneg %p107
        $region50: #{tpu_custom_call.1} parent=39 // pred_check_branch
          %253 = sbr.rel (%p251) target = $region52
        $region51: #{tpu_custom_call.1} parent=39 // pred_region
          %255 = dma.done [#allocation8], 6144
        $region52: #{tpu_custom_call.1} parent=39 // pred_fallthru
          _
        %s256 = sand.u32 %s31, 1
        %s257 = scalar_lea.sflag [#allocation5], %s256
        %s258 = sand.u32 %s31, 1
        %s259 = smul.addr %s258, 16
        %s260 = scalar_lea.vmem [#allocation4], %s259
        %p261 = pneg %p44
        %p262 = pneg %p41
        %p263 = pneg %p65
        %p264 = pneg %p62
        %p265 = pneg %p86
        %p266 = pneg %p83
        %p267 = pneg %p107
        %p268 = pneg %p104
        %p269 = pneg %p128
        %p270 = pneg %p125
        %p271 = pneg %p154
        %p272 = pneg %p151
        %s273 = sand.u32 %s141, 1
        %s274 = scalar_lea.sflag [#allocation6], %s273
        %s275 = sand.u32 %s141, 1
        %s276 = smul.addr %s275, 16
        %s277 = scalar_lea.vmem [#allocation10], %s276
        %vm278 = vcmask 523264
        %279 = vst.msk [vmem:[#allocation2] sm:$0xff] %vm278, 0.0
        %280 = vst.msk [vmem:[#allocation2 + $0x8] sm:$0xff] %vm278, 0.0
        %vm281 = vcmask 517120
        %282 = vst.msk [vmem:[#allocation2 + $0x10] sm:$0x3] %vm281, 0.0
        %v283 = vld [vmem:[%s240] sm:$0xff]
        %v284 = vld [vmem:[%s240 + $0x8] sm:$0xff]
        %285 = vst.msk [vmem:[#allocation2 + $0x1] sm:$0xff] %vm278, %v283
        %286 = vst.msk [vmem:[#allocation2 + $0x9] sm:$0xff] %vm278, %v284
        %v287 = vld [vmem:[#allocation2] sm:$0xff]
        %v288 = vld [vmem:[#allocation2 + $0x8] sm:$0xff]
        %v289 = vld [vmem:[#allocation7] sm:$0xff]
        %v290 = vld [vmem:[#allocation7 + $0x8] sm:$0xff]
        %v291 = vld [vmem:[#allocation7 + $0x10] sm:$0xff]
        %v292 = vld [vmem:[#allocation7 + $0x18] sm:$0xff]
        %v293 = vld [vmem:[#allocation7 + $0x20] sm:$0xff]
        %v294 = vld [vmem:[#allocation7 + $0x28] sm:$0xff]
        %v295 = vld [vmem:[#allocation7 + $0x30] sm:$0xff]
        %v296 = vld [vmem:[#allocation7 + $0x38] sm:$0xff]
        %v297 = vld [vmem:[#allocation2 + $0x1] sm:$0xff]
        %v298 = vld [vmem:[#allocation2 + $0x9] sm:$0xff]
        %s299 = scalar_lea.vmem [#allocation7], 64
        %v300 = vld [vmem:[%s299] sm:$0xff]
        %v301 = vld [vmem:[%s299 + $0x8] sm:$0xff]
        %v302 = vld [vmem:[%s299 + $0x10] sm:$0xff]
        %v303 = vld [vmem:[%s299 + $0x18] sm:$0xff]
        %v304 = vld [vmem:[%s299 + $0x20] sm:$0xff]
        %v305 = vld [vmem:[%s299 + $0x28] sm:$0xff]
        %v306 = vld [vmem:[%s299 + $0x30] sm:$0xff]
        %v307 = vld [vmem:[%s299 + $0x38] sm:$0xff]
        %v309 = vsel %vm278, %v297, 0
        %v312 = vsel %vm278, %v298, 0
        %314 = vmatpush.msra.mxu0 0.0
        %315 = vmatpush.msra.mxu0 0.0
        %316 = vmatpush.msra.mxu0 0.0
        %317 = vmatpush.msra.mxu0 0.0
        %318 = vmatpush.msra.mxu0 0.0
        %319 = vmatpush.msra.mxu0 0.0
        %320 = vmatpush.msra.mxu0 0.0
        %321 = vmatpush.msra.mxu0 0.0
        %322 = vmatpush.msra.mxu0 %v307
        %323 = vmatpush.msra.mxu0 %v306
        %324 = vmatpush.msra.mxu0 %v305
        %325 = vmatpush.msra.mxu0 %v304
        %326 = vmatpush.msra.mxu0 %v303
        %327 = vmatpush.msra.mxu0 %v302
        %328 = vmatpush.msra.mxu0 %v301
        %329 = vmatpush.msra.mxu0 %v300
        %330 = vmatmul.f32.gmra.mxu0 %v309
        %v331 = vpop.f32.mrf.mxu0
        %v332 = vadd.f32 0.0, %v331
        %333 = vmatmul.f32.gmra.mxu0 %v312
        %v334 = vpop.f32.mrf.mxu0
        %v335 = vadd.f32 0.0, %v334
        %336 = vdwg.mxu0
        %v338 = vsel %vm278, %v287, 0
        %v341 = vsel %vm278, %v288, 0
        %343 = vmatpush.msra.mxu0 0.0
        %344 = vmatpush.msra.mxu0 0.0
        %345 = vmatpush.msra.mxu0 0.0
        %346 = vmatpush.msra.mxu0 0.0
        %347 = vmatpush.msra.mxu0 0.0
        %348 = vmatpush.msra.mxu0 0.0
        %349 = vmatpush.msra.mxu0 0.0
        %350 = vmatpush.msra.mxu0 0.0
        %351 = vmatpush.msra.mxu0 %v296
        %352 = vmatpush.msra.mxu0 %v295
        %353 = vmatpush.msra.mxu0 %v294
        %354 = vmatpush.msra.mxu0 %v293
        %355 = vmatpush.msra.mxu0 %v292
        %356 = vmatpush.msra.mxu0 %v291
        %357 = vmatpush.msra.mxu0 %v290
        %358 = vmatpush.msra.mxu0 %v289
        %359 = vmatmul.f32.gmra.mxu0 %v338
        %v360 = vpop.f32.mrf.mxu0
        %v361 = vadd.f32 %v332, %v360
        %362 = vmatmul.f32.gmra.mxu0 %v341
        %v363 = vpop.f32.mrf.mxu0
        %v364 = vadd.f32 %v335, %v363
        %365 = vdwg.mxu0
        %v366 = vld [vmem:[#allocation2 + $0x2] sm:$0xff]
        %v367 = vld [vmem:[#allocation2 + $0xa] sm:$0xff]
        %s368 = scalar_lea.vmem [#allocation7], 128
        %v369 = vld [vmem:[%s368] sm:$0xff]
        %v370 = vld [vmem:[%s368 + $0x8] sm:$0xff]
        %v371 = vld [vmem:[%s368 + $0x10] sm:$0xff]
        %v372 = vld [vmem:[%s368 + $0x18] sm:$0xff]
        %v373 = vld [vmem:[%s368 + $0x20] sm:$0xff]
        %v374 = vld [vmem:[%s368 + $0x28] sm:$0xff]
        %v375 = vld [vmem:[%s368 + $0x30] sm:$0xff]
        %v376 = vld [vmem:[%s368 + $0x38] sm:$0xff]
        %v378 = vsel %vm278, %v366, 0
        %v381 = vsel %vm278, %v367, 0
        %383 = vmatpush.msra.mxu0 0.0
        %384 = vmatpush.msra.mxu0 0.0
        %385 = vmatpush.msra.mxu0 0.0
        %386 = vmatpush.msra.mxu0 0.0
        %387 = vmatpush.msra.mxu0 0.0
        %388 = vmatpush.msra.mxu0 0.0
        %389 = vmatpush.msra.mxu0 0.0
        %390 = vmatpush.msra.mxu0 0.0
        %391 = vmatpush.msra.mxu0 %v376
        %392 = vmatpush.msra.mxu0 %v375
        %393 = vmatpush.msra.mxu0 %v374
        %394 = vmatpush.msra.mxu0 %v373
        %395 = vmatpush.msra.mxu0 %v372
        %396 = vmatpush.msra.mxu0 %v371
        %397 = vmatpush.msra.mxu0 %v370
        %398 = vmatpush.msra.mxu0 %v369
        %399 = vmatmul.f32.gmra.mxu0 %v378
        %v400 = vpop.f32.mrf.mxu0
        %v401 = vadd.f32 0.0, %v400
        %402 = vmatmul.f32.gmra.mxu0 %v381
        %v403 = vpop.f32.mrf.mxu0
        %v404 = vadd.f32 0.0, %v403
        %405 = vdwg.mxu0
        %v406 = vadd.f32 %v361, %v401
        %v407 = vadd.f32 %v364, %v404
        %v408 = vld [vmem:[%s2] sm:$0x1]
        %v410 = vperm.slane %v408, 0
        %v412 = vadd.f32 %v406, %v410
        %v413 = vadd.f32 %v407, %v410
        %v414 = vmax.f32 %v412, 0.0
        %v415 = vmax.f32 %v413, 0.0
        %416 = vst [vmem:[#allocation3] sm:$0xff] 0.0
        %417 = vst [vmem:[#allocation3 + $0x8] sm:$0xff] 0.0
        %418 = vst [vmem:[#allocation3 + $0x10] sm:$0x3] 0.0
        %419 = vst [vmem:[#allocation3 + $0x1] sm:$0xff] %v414
        %420 = vst [vmem:[#allocation3 + $0x9] sm:$0xff] %v415
        %v421 = vld [vmem:[#allocation3] sm:$0xff]
        %v422 = vld [vmem:[#allocation3 + $0x8] sm:$0xff]
        %v423 = vld [vmem:[#allocation9] sm:$0xff]
        %v424 = vld [vmem:[#allocation9 + $0x8] sm:$0xff]
        %v425 = vld [vmem:[#allocation9 + $0x10] sm:$0xff]
        %v426 = vld [vmem:[#allocation9 + $0x18] sm:$0xff]
        %v427 = vld [vmem:[#allocation9 + $0x20] sm:$0xff]
        %v428 = vld [vmem:[#allocation9 + $0x28] sm:$0xff]
        %v429 = vld [vmem:[#allocation9 + $0x30] sm:$0xff]
        %v430 = vld [vmem:[#allocation9 + $0x38] sm:$0xff]
        %v431 = vld [vmem:[#allocation9 + $0x40] sm:$0xff]
        %v432 = vld [vmem:[#allocation9 + $0x48] sm:$0xff]
        %v433 = vld [vmem:[#allocation9 + $0x50] sm:$0xff]
        %v434 = vld [vmem:[#allocation9 + $0x58] sm:$0xff]
        %v435 = vld [vmem:[#allocation9 + $0x60] sm:$0xff]
        %v436 = vld [vmem:[#allocation9 + $0x68] sm:$0xff]
        %v437 = vld [vmem:[#allocation9 + $0x70] sm:$0xff]
        %v438 = vld [vmem:[#allocation9 + $0x78] sm:$0xff]
        %v439 = vld [vmem:[#allocation3 + $0x1] sm:$0xff]
        %v440 = vld [vmem:[#allocation3 + $0x9] sm:$0xff]
        %s441 = scalar_lea.vmem [#allocation9], 128
        %v442 = vld [vmem:[%s441] sm:$0xff]
        %v443 = vld [vmem:[%s441 + $0x8] sm:$0xff]
        %v444 = vld [vmem:[%s441 + $0x10] sm:$0xff]
        %v445 = vld [vmem:[%s441 + $0x18] sm:$0xff]
        %v446 = vld [vmem:[%s441 + $0x20] sm:$0xff]
        %v447 = vld [vmem:[%s441 + $0x28] sm:$0xff]
        %v448 = vld [vmem:[%s441 + $0x30] sm:$0xff]
        %v449 = vld [vmem:[%s441 + $0x38] sm:$0xff]
        %v450 = vld [vmem:[%s441 + $0x40] sm:$0xff]
        %v451 = vld [vmem:[%s441 + $0x48] sm:$0xff]
        %v452 = vld [vmem:[%s441 + $0x50] sm:$0xff]
        %v453 = vld [vmem:[%s441 + $0x58] sm:$0xff]
        %v454 = vld [vmem:[%s441 + $0x60] sm:$0xff]
        %v455 = vld [vmem:[%s441 + $0x68] sm:$0xff]
        %v456 = vld [vmem:[%s441 + $0x70] sm:$0xff]
        %v457 = vld [vmem:[%s441 + $0x78] sm:$0xff]
        %458 = vmatpush.msra.mxu0 %v457
        %459 = vmatpush.msra.mxu0 %v456
        %460 = vmatpush.msra.mxu0 %v455
        %461 = vmatpush.msra.mxu0 %v454
        %462 = vmatpush.msra.mxu0 %v453
        %463 = vmatpush.msra.mxu0 %v452
        %464 = vmatpush.msra.mxu0 %v451
        %465 = vmatpush.msra.mxu0 %v450
        %466 = vmatpush.msra.mxu0 %v449
        %467 = vmatpush.msra.mxu0 %v448
        %468 = vmatpush.msra.mxu0 %v447
        %469 = vmatpush.msra.mxu0 %v446
        %470 = vmatpush.msra.mxu0 %v445
        %471 = vmatpush.msra.mxu0 %v444
        %472 = vmatpush.msra.mxu0 %v443
        %473 = vmatpush.msra.mxu0 %v442
        %474 = vmatmul.f32.gmra.mxu0 %v439
        %v475 = vpop.f32.mrf.mxu0
        %v476 = vadd.f32 0.0, %v475
        %477 = vmatmul.f32.gmra.mxu0 %v440
        %v478 = vpop.f32.mrf.mxu0
        %v479 = vadd.f32 0.0, %v478
        %480 = vdwg.mxu0
        %481 = vmatpush.msra.mxu0 %v438
        %482 = vmatpush.msra.mxu0 %v437
        %483 = vmatpush.msra.mxu0 %v436
        %484 = vmatpush.msra.mxu0 %v435
        %485 = vmatpush.msra.mxu0 %v434
        %486 = vmatpush.msra.mxu0 %v433
        %487 = vmatpush.msra.mxu0 %v432
        %488 = vmatpush.msra.mxu0 %v431
        %489 = vmatpush.msra.mxu0 %v430
        %490 = vmatpush.msra.mxu0 %v429
        %491 = vmatpush.msra.mxu0 %v428
        %492 = vmatpush.msra.mxu0 %v427
        %493 = vmatpush.msra.mxu0 %v426
        %494 = vmatpush.msra.mxu0 %v425
        %495 = vmatpush.msra.mxu0 %v424
        %496 = vmatpush.msra.mxu0 %v423
        %497 = vmatmul.f32.gmra.mxu0 %v421
        %v498 = vpop.f32.mrf.mxu0
        %v499 = vadd.f32 %v476, %v498
        %500 = vmatmul.f32.gmra.mxu0 %v422
        %v501 = vpop.f32.mrf.mxu0
        %v502 = vadd.f32 %v479, %v501
        %503 = vdwg.mxu0
        %v504 = vld [vmem:[#allocation3 + $0x2] sm:$0xff]
        %v505 = vld [vmem:[#allocation3 + $0xa] sm:$0xff]
        %s506 = scalar_lea.vmem [#allocation9], 256
        %v507 = vld [vmem:[%s506] sm:$0xff]
        %v508 = vld [vmem:[%s506 + $0x8] sm:$0xff]
        %v509 = vld [vmem:[%s506 + $0x10] sm:$0xff]
        %v510 = vld [vmem:[%s506 + $0x18] sm:$0xff]
        %v511 = vld [vmem:[%s506 + $0x20] sm:$0xff]
        %v512 = vld [vmem:[%s506 + $0x28] sm:$0xff]
        %v513 = vld [vmem:[%s506 + $0x30] sm:$0xff]
        %v514 = vld [vmem:[%s506 + $0x38] sm:$0xff]
        %v515 = vld [vmem:[%s506 + $0x40] sm:$0xff]
        %v516 = vld [vmem:[%s506 + $0x48] sm:$0xff]
        %v517 = vld [vmem:[%s506 + $0x50] sm:$0xff]
        %v518 = vld [vmem:[%s506 + $0x58] sm:$0xff]
        %v519 = vld [vmem:[%s506 + $0x60] sm:$0xff]
        %v520 = vld [vmem:[%s506 + $0x68] sm:$0xff]
        %v521 = vld [vmem:[%s506 + $0x70] sm:$0xff]
        %v522 = vld [vmem:[%s506 + $0x78] sm:$0xff]
        %523 = vmatpush.msra.mxu0 %v522
        %524 = vmatpush.msra.mxu0 %v521
        %525 = vmatpush.msra.mxu0 %v520
        %526 = vmatpush.msra.mxu0 %v519
        %527 = vmatpush.msra.mxu0 %v518
        %528 = vmatpush.msra.mxu0 %v517
        %529 = vmatpush.msra.mxu0 %v516
        %530 = vmatpush.msra.mxu0 %v515
        %531 = vmatpush.msra.mxu0 %v514
        %532 = vmatpush.msra.mxu0 %v513
        %533 = vmatpush.msra.mxu0 %v512
        %534 = vmatpush.msra.mxu0 %v511
        %535 = vmatpush.msra.mxu0 %v510
        %536 = vmatpush.msra.mxu0 %v509
        %537 = vmatpush.msra.mxu0 %v508
        %538 = vmatpush.msra.mxu0 %v507
        %539 = vmatmul.f32.gmra.mxu0 %v504
        %v540 = vpop.f32.mrf.mxu0
        %v541 = vadd.f32 0.0, %v540
        %542 = vmatmul.f32.gmra.mxu0 %v505
        %v543 = vpop.f32.mrf.mxu0
        %v544 = vadd.f32 0.0, %v543
        %545 = vdwg.mxu0
        %v546 = vadd.f32 %v499, %v541
        %v547 = vadd.f32 %v502, %v544
        %v548 = vld [vmem:[%s4] sm:$0x1]
        %v550 = vperm.slane %v548, 0
        %v552 = vadd.f32 %v546, %v550
        %v553 = vadd.f32 %v547, %v550
        %v554 = vmax.f32 %v552, 0.0
        %v555 = vmax.f32 %v553, 0.0
        %556 = vst [vmem:[%s277] sm:$0xff] %v554
        %557 = vst [vmem:[%s277 + $0x8] sm:$0xff] %v555
        %s558 = sand.u32 %s141, 1
        %s559 = scalar_lea.sflag [#allocation6], %s558
        %s560 = sand.u32 %s141, 1
        %s561 = smul.addr %s560, 16
        %s562 = scalar_lea.vmem [#allocation10], %s561
        // Predicated region
        $region53: #{tpu_custom_call.1} parent=39 // pred_check
          %p563 = pneg %p151
        $region54: #{tpu_custom_call.1} parent=39 // pred_check_branch
          %565 = sbr.rel (%p563) target = $region56
        $region55: #{tpu_custom_call.1} parent=39 // pred_region
          %567 = vsyncadd %s559, 0
          %s568 = smul.addr %s23, 2
          %s569 = smul.addr %s568, 8
          %s570 = scalar_lea.hbm %s5, %s569
          %s571 = sshll.u32 %s562, 4
          %s572 = int_to_ptr.vmem [resolvable:$true] %s571
          %s573 = sshll.u32 %s570, 4
          %s574 = int_to_ptr.hbm [resolvable:$true] %s573
          %579 = dma.vmem_to_hbm [thread:$0]  %s572, 256, %s574, %s559, 128, 128, 8
        $region56: #{tpu_custom_call.1} parent=39 // pred_fallthru
          _
      $region40: #{tpu_custom_call.1} parent=5 // pred_fallthru
        _
      %p580 = scmp.le.s32.totalorder 2, %s18
      // Predicated region
      $region57: #{tpu_custom_call.1} parent=5 // pred_check
        %p581 = pneg %p580
      $region58: #{tpu_custom_call.1} parent=5 // pred_check_branch
        %583 = sbr.rel (%p581) target = $region60
      $region59: #{tpu_custom_call.1} parent=5 // pred_region
        %s584 = ssub.s32 %s18, 2
        // Predicated region
        $region61: #{tpu_custom_call.1} parent=59 // pred_check
          %p585 = pneg %p157
        $region62: #{tpu_custom_call.1} parent=59 // pred_check_branch
          %587 = sbr.rel (%p585) target = $region64
        $region63: #{tpu_custom_call.1} parent=59 // pred_region
          %s588 = sand.u32 %s142, 1
          %s589 = scalar_lea.sflag [#allocation6], %s588
          %s590 = sand.u32 %s142, 1
          %s591 = smul.addr %s590, 16
          %s592 = scalar_lea.vmem [#allocation10], %s591
          %594 = dma.done %s589, 256
        $region64: #{tpu_custom_call.1} parent=59 // pred_fallthru
          _
      $region60: #{tpu_custom_call.1} parent=5 // pred_fallthru
        _
    $region6: #{tpu_custom_call.1} parent=1 // loop_footer
      %s22 = sadd.s32 1, %s18
    $region7: #{tpu_custom_call.1} parent=1 // loop_footer_branch
      %17 = sbr.rel target = $region3
    $region8: #{tpu_custom_call.1} parent=1 // loop_exit
      _
    %595 = vsyncpa [#allocation5], 1
    %s596 = scalar_lea.sflag [#allocation5], 1
    %597 = vsyncpa %s596, 1
    %598 = vsyncpa [#allocation8], 1
    %599 = vsyncpa [#allocation6], 1
    %s600 = scalar_lea.sflag [#allocation6], 1
    %601 = vsyncpa %s600, 1

</llo_original>
